<compile_context>
chip_gen: v7x
topology: tpu7x:2x2x1
jax: 0.10.0
libtpu: 0.0.40
codegen_flags: <defaults>
</compile_context>

<pallas_src>
import functools

import jax
import jax.numpy as jnp
from jax.experimental import pallas as pl
from jax.experimental.pallas import tpu as pltpu


_LANE = 128
_MIB = 1024 * 1024

_vmem_limit_cache = None


def _vmem_limit_bytes():
    """Generation-aware scoped-VMEM limit (v7x: 64 MiB phys -> ~48; else ~96)."""
    global _vmem_limit_cache
    if _vmem_limit_cache is None:
        cap = None
        try:
            cap = int(pltpu.get_tpu_info().vmem_capacity_bytes)
        except Exception:
            cap = None
        if not cap or cap <= 0:
            cap = 128 * _MIB
        _vmem_limit_cache = int(min((cap * 3) // 4, 96 * _MIB))
    return _vmem_limit_cache


def _sublane_multiple(dtype):
    """Packed sublane multiple: 8 for 32-bit, 16 for 16-bit, 32 for 8-bit."""
    itemsize = max(int(jnp.dtype(dtype).itemsize), 1)
    return 8 * max(1, 4 // itemsize)


def _choose_tiles(N, C, S, itemsize, budget, sub):
    """Pick (NB, TC, TS) tile for an (N, C, S) array: lane-dense, budgeted."""
    elem = max(int(itemsize), 1)
    # Lane (spatial) tile: multiple of 128, or the full extent (always legal).
    if S % _LANE == 0:
        TS = min(S, 8192)
    elif S * elem * sub <= budget:
        TS = S
    else:
        TS = 8192  # partial tail block; masked in the stats kernel
    # Channel tile: multiple of the packed sublane count, or full C.
    row_bytes = max(TS * elem, 1)
    max_tc = max(sub, (budget // row_bytes) // sub * sub)
    TC = C if C <= max_tc else max_tc
    # Batch fold: if the (TC, TS) tile is small (e.g. late-conv C large, S tiny),
    # fold several batch rows into one block to amortize per-step overhead.
    NB = 1
    if C <= max_tc:
        tile_bytes = max(TC * TS * elem, 1)
        nb_cap = max(1, budget // tile_bytes)
        for d in range(min(N, nb_cap), 0, -1):
            if N % d == 0:       # NB must divide N (no batch-tail masking)
                NB = d
                break
    return NB, TC, TS


def _choose_fused_tc(N, C, S, vmem_limit, sub):
    """Channel-block size for the fused single-pass kernel, or None if x is
    too big for a fused slab (fall back to the two-pass kernels)."""
    budget = vmem_limit // 8   # slab appears ~6-7x (in/out double-buf + f32 tmp)
    per_channel = N * S * 4    # f32 working bytes per channel
    if per_channel <= 0:
        return None
    max_tc = budget // per_channel
    if max_tc >= C:
        return C
    max_tc = (max_tc // sub) * sub
    if max_tc >= sub:
        return int(max_tc)
    return None


# ---------------------------------------------------------------------------
# Fused single-pass kernel: stats + normalize on one channel-block slab.
# ---------------------------------------------------------------------------
def _fused_bn_kernel(x_ref, w_ref, b_ref, o_ref, mean_ref, var_ref,
                     *, inv_count, eps):
    # x_ref/o_ref: (N, TC, S);  w/b/mean/var: (TC, 1)
    x = x_ref[...].astype(jnp.float32)
    s = jnp.sum(jnp.sum(x, axis=-1, keepdims=True), axis=0)        # (TC, 1)
    mean = s * inv_count
    xc = x - mean[None, :, :]
    ss = jnp.sum(jnp.sum(xc * xc, axis=-1, keepdims=True), axis=0)  # (TC, 1)
    var = ss * inv_count                                            # biased
    scale = w_ref[...] * jax.lax.rsqrt(var + eps)
    shift = b_ref[...] - mean * scale
    o_ref[...] = (x * scale[None, :, :] + shift[None, :, :]).astype(o_ref.dtype)
    mean_ref[...] = mean
    var_ref[...] = var


def _fused_bn_pallas(x3d, weight, bias, TC, eps, vmem_limit):
    N, C, S = x3d.shape
    L = N * S
    w2d = weight.reshape(C, 1).astype(jnp.float32)
    b2d = bias.reshape(C, 1).astype(jnp.float32)
    kernel = functools.partial(_fused_bn_kernel,
                               inv_count=1.0 / float(L), eps=float(eps))
    return pl.pallas_call(
        kernel,
        out_shape=(
            jax.ShapeDtypeStruct((N, C, S), x3d.dtype),
            jax.ShapeDtypeStruct((C, 1), jnp.float32),
            jax.ShapeDtypeStruct((C, 1), jnp.float32),
        ),
        grid_spec=pltpu.PrefetchScalarGridSpec(
            num_scalar_prefetch=0,
            grid=(pl.cdiv(C, TC),),
            in_specs=[
                pl.BlockSpec((N, TC, S), lambda c: (0, c, 0)),
                pl.BlockSpec((TC, 1), lambda c: (c, 0)),
                pl.BlockSpec((TC, 1), lambda c: (c, 0)),
            ],
            out_specs=(
                pl.BlockSpec((N, TC, S), lambda c: (0, c, 0)),
                pl.BlockSpec((TC, 1), lambda c: (c, 0)),
                pl.BlockSpec((TC, 1), lambda c: (c, 0)),
            ),
        ),
        compiler_params=pltpu.CompilerParams(
            dimension_semantics=("parallel",),
            vmem_limit_bytes=vmem_limit),
    )(x3d, w2d, b2d)


# ---------------------------------------------------------------------------
# Two-pass fallback, kernel 1: per-(n-block, channel) sum / sum-of-squares.
# ---------------------------------------------------------------------------
def _stats_kernel(x_ref, sum_ref, ss_ref, *, S, TS, mask_tail):
    # x_ref: (NB, TC, TS); sum_ref / ss_ref: (TC, 1), resident across S axis.
    @pl.when(pl.program_id(2) == 0)
    def _():
        sum_ref[...] = jnp.zeros_like(sum_ref)
        ss_ref[...] = jnp.zeros_like(ss_ref)

    def accumulate(x):
        sum_ref[...] += jnp.sum(jnp.sum(x, axis=-1, keepdims=True), axis=0)
        ss_ref[...] += jnp.sum(jnp.sum(x * x, axis=-1, keepdims=True), axis=0)

    if not mask_tail:
        accumulate(x_ref[...].astype(jnp.float32))
    else:
        # Mask only the LAST spatial block; all other blocks take the cheap path.
        is_last = pl.program_id(2) == pl.num_programs(2) - 1

        @pl.when(jnp.logical_not(is_last))
        def _():
            accumulate(x_ref[...].astype(jnp.float32))

        @pl.when(is_last)
        def _():
            x = x_ref[...].astype(jnp.float32)
            lane = jax.lax.broadcasted_iota(jnp.int32, x.shape,
                                            dimension=x.ndim - 1)
            s_start = pl.program_id(2) * TS
            x = jnp.where(s_start + lane < S, x, 0.0)
            accumulate(x)


def _batch_stats_pallas(x3d, NB, TC, TS, vmem_limit):
    """x3d: (N, C, S) -> partial (sum, sumsq) of shape (N//NB, C, 1), f32."""
    N, C, S = x3d.shape
    grid = (N // NB, pl.cdiv(C, TC), pl.cdiv(S, TS))
    kernel = functools.partial(_stats_kernel, S=S, TS=TS,
                               mask_tail=(S % TS) != 0)
    psum, psq = pl.pallas_call(
        kernel,
        out_shape=(
            jax.ShapeDtypeStruct((N // NB, C, 1), jnp.float32),
            jax.ShapeDtypeStruct((N // NB, C, 1), jnp.float32),
        ),
        grid_spec=pltpu.PrefetchScalarGridSpec(
            num_scalar_prefetch=0,
            grid=grid,
            in_specs=[pl.BlockSpec((NB, TC, TS), lambda n, c, s: (n, c, s))],
            out_specs=(
                pl.BlockSpec((None, TC, 1), lambda n, c, s: (n, c, 0)),
                pl.BlockSpec((None, TC, 1), lambda n, c, s: (n, c, 0)),
            ),
        ),
        compiler_params=pltpu.CompilerParams(
            dimension_semantics=("parallel", "parallel", "arbitrary"),
            vmem_limit_bytes=vmem_limit),
    )(x3d)
    return psum, psq


# ---------------------------------------------------------------------------
# Two-pass fallback, kernel 2: y = x * scale + shift (per-channel scale/shift).
# ---------------------------------------------------------------------------
def _normalize_kernel(x_ref, scale_ref, shift_ref, o_ref):
    x = x_ref[...].astype(jnp.float32)                # (NB, TC, TS)
    scale = scale_ref[...][None, :, :]                # (1, TC, 1)
    shift = shift_ref[...][None, :, :]
    o_ref[...] = (x * scale + shift).astype(o_ref.dtype)


def _normalize_pallas(x3d, scale, shift, NB, TC, TS, out_dtype, vmem_limit):
    N, C, S = x3d.shape
    grid = (N // NB, pl.cdiv(C, TC), pl.cdiv(S, TS))
    scale2d = scale.reshape(C, 1).astype(jnp.float32)
    shift2d = shift.reshape(C, 1).astype(jnp.float32)
    return pl.pallas_call(
        _normalize_kernel,
        out_shape=jax.ShapeDtypeStruct((N, C, S), out_dtype),
        grid_spec=pltpu.PrefetchScalarGridSpec(
            num_scalar_prefetch=0,
            grid=grid,
            in_specs=[
                pl.BlockSpec((NB, TC, TS), lambda n, c, s: (n, c, s)),
                pl.BlockSpec((TC, 1), lambda n, c, s: (c, 0)),
                pl.BlockSpec((TC, 1), lambda n, c, s: (c, 0)),
            ],
            out_specs=pl.BlockSpec((NB, TC, TS), lambda n, c, s: (n, c, s)),
        ),
        compiler_params=pltpu.CompilerParams(
            dimension_semantics=("parallel", "parallel", "parallel"),
            vmem_limit_bytes=vmem_limit),
    )(x3d, scale2d, shift2d)


class PallasBatchNorm2d:
    """Mirror of torch.nn._BatchNorm (BatchNorm2d flavor) forward."""

    def __init__(self, num_features, eps=1e-5, momentum=0.1,
                 affine=True, track_running_stats=True, dtype=jnp.float32):
        self.num_features = num_features
        self.eps = eps
        self.momentum = momentum
        self.affine = affine
        self.track_running_stats = track_running_stats
        # deterministic init (matches reset_parameters / reset_running_stats)
        if affine:
            self.weight = jnp.ones((num_features,), dtype)
            self.bias = jnp.zeros((num_features,), dtype)
        else:
            self.weight = None
            self.bias = None
        if track_running_stats:
            self.running_mean = jnp.zeros((num_features,), dtype)
            self.running_var = jnp.ones((num_features,), dtype)
            self.num_batches_tracked = 0
        else:
            self.running_mean = None
            self.running_var = None
            self.num_batches_tracked = None
        self.training = True
        self._force_two_pass = False   # testing hook: skip the fused path

    def __call__(self, x):
        # x: NCHW, shape (N, C, H, W)
        assert x.ndim == 4, "expected 4D input (BatchNorm2d)"
        N, C, H, W = x.shape
        assert C == self.num_features
        S = H * W
        L = N * S

        if self.momentum is None:
            exponential_average_factor = 0.0
        else:
            exponential_average_factor = self.momentum
        if self.training and self.track_running_stats:
            if self.num_batches_tracked is not None:
                self.num_batches_tracked += 1
                if self.momentum is None:
                    exponential_average_factor = 1.0 / float(
                        self.num_batches_tracked)

        bn_training = self.training or (
            self.running_mean is None and self.running_var is None)

        # Free, contiguous reshape (no HBM transpose): channels on sublanes,
        # spatial on lanes.
        x3d = x.reshape(N, C, S)
        vmem_limit = _vmem_limit_bytes()
        sub = _sublane_multiple(x.dtype)
        itemsize = jnp.dtype(x.dtype).itemsize

        weight = (self.weight.astype(jnp.float32) if self.affine
                  else jnp.ones((C,), jnp.float32))
        bias = (self.bias.astype(jnp.float32) if self.affine
                else jnp.zeros((C,), jnp.float32))

        out3d = None
        if bn_training:
            fused_tc = (None if self._force_two_pass
                        else _choose_fused_tc(N, C, S, vmem_limit, sub))
            if fused_tc is not None:
                # Single pass: 1 read + 1 write of x.
                out3d, mean2d, var2d = _fused_bn_pallas(
                    x3d, weight, bias, fused_tc, self.eps, vmem_limit)
                mean = mean2d.reshape(C)
                var_biased = var2d.reshape(C)
            else:
                # Two-pass fallback: stats tiles get the bigger budget (one
                # big stream), normalize tiles sized separately below.
                NB, TC, TS = _choose_tiles(
                    N, C, S, itemsize, min(vmem_limit // 3, 16 * _MIB), sub)
                psum, psq = _batch_stats_pallas(x3d, NB, TC, TS, vmem_limit)
                total_sum = jnp.sum(psum, axis=(0, 2))            # (C,)
                total_sq = jnp.sum(psq, axis=(0, 2))              # (C,)
                mean = total_sum / L
                # E[x^2] - mean^2 can go slightly negative -> clamp.
                var_biased = jnp.maximum(total_sq / L - mean * mean, 0.0)

            if self.track_running_stats:
                var_unbiased = var_biased * (L / max(L - 1, 1))
                f = exponential_average_factor
                self.running_mean = ((1.0 - f) * self.running_mean
                                     + f * mean.astype(self.running_mean.dtype))
                self.running_var = ((1.0 - f) * self.running_var
                                    + f * var_unbiased.astype(
                                        self.running_var.dtype))
            use_mean, use_var = mean, var_biased
        else:
            use_mean = self.running_mean.astype(jnp.float32)
            use_var = self.running_var.astype(jnp.float32)

        if out3d is None:
            # Precompute per-channel scale/shift so the normalize kernel is a
            # single FMA per element (pure DMA-bound).
            scale = weight * jax.lax.rsqrt(use_var + self.eps)
            shift = bias - use_mean * scale
            NB, TC, TS = _choose_tiles(
                N, C, S, itemsize, min(vmem_limit // 5, 6 * _MIB), sub)
            out3d = _normalize_pallas(x3d, scale, shift, NB, TC, TS,
                                      x.dtype, vmem_limit)
        return out3d.reshape(N, C, H, W)


def _reference_batchnorm(x, mean, var, weight, bias, eps):
    xf = x.astype(jnp.float32)
    m = mean[None, :, None, None].astype(jnp.float32)
    v = var[None, :, None, None].astype(jnp.float32)
    w = weight[None, :, None, None].astype(jnp.float32)
    b = bias[None, :, None, None].astype(jnp.float32)
    return ((xf - m) * jax.lax.rsqrt(v + eps) * w + b).astype(x.dtype)


if __name__ == "__main__":
    key = jax.random.PRNGKey(0)
    N, C, H, W = 2, 4, 16, 16
    x = jax.random.normal(key, (N, C, H, W), dtype=jnp.float32) * 2.0 + 0.5

    bn = PallasBatchNorm2d(num_features=C, eps=1e-5, momentum=0.1,
                           affine=True, track_running_stats=True)

    # --- training mode (batch statistics, fused single-pass kernel) ---
    bn.training = True
    y_train = jax.block_until_ready(bn(x))

    xf = x.astype(jnp.float32)
    mean_ref = jnp.mean(xf, axis=(0, 2, 3))
    var_ref = jnp.mean(
        (xf - mean_ref[None, :, None, None]) ** 2, axis=(0, 2, 3))
    y_ref = _reference_batchnorm(x, mean_ref, var_ref,
                                 bn.weight, bn.bias, bn.eps)
    assert jnp.allclose(y_train, y_ref, atol=1e-4, rtol=1e-4), "train mismatch"

    # running-stats update check (momentum=0.1, unbiased batch variance)
    L = N * H * W
    rm_ref = 0.9 * jnp.zeros((C,)) + 0.1 * mean_ref
    rv_ref = 0.9 * jnp.ones((C,)) + 0.1 * var_ref * (L / (L - 1))
    assert jnp.allclose(bn.running_mean, rm_ref, atol=1e-4, rtol=1e-4), \
        "running_mean mismatch"
    assert jnp.allclose(bn.running_var, rv_ref, atol=1e-4, rtol=1e-4), \
        "running_var mismatch"

    # --- eval mode (running statistics, normalize kernel) ---
    bn.training = False
    y_eval = jax.block_until_ready(bn(x))
    y_eval_ref = _reference_batchnorm(x, bn.running_mean, bn.running_var,
                                      bn.weight, bn.bias, bn.eps)
    assert jnp.allclose(y_eval, y_eval_ref, atol=1e-4, rtol=1e-4), \
        "eval mismatch"

    # --- two-pass fallback path (stats + normalize kernels) ---
    bn2 = PallasBatchNorm2d(num_features=C, eps=1e-5, momentum=0.1,
                            affine=True, track_running_stats=True)
    bn2._force_two_pass = True
    bn2.training = True
    y_train2 = jax.block_until_ready(bn2(x))
    assert jnp.allclose(y_train2, y_ref, atol=1e-4, rtol=1e-4), \
        "two-pass train mismatch"

    print("KERNEL_OK")
</pallas_src>

<mosaic_0001>
module attributes {stable_mosaic.version = 11 : i64} {
  func.func @_fused_bn_kernel(%arg0: i32, %arg1: memref<2x4x256xf32, #tpu.memory_space<vmem>>, %arg2: memref<4x1xf32, #tpu.memory_space<vmem>>, %arg3: memref<4x1xf32, #tpu.memory_space<vmem>>, %arg4: memref<2x4x256xf32, #tpu.memory_space<vmem>>, %arg5: memref<4x1xf32, #tpu.memory_space<vmem>>, %arg6: memref<4x1xf32, #tpu.memory_space<vmem>>) attributes {dimension_semantics = [#tpu.dimension_semantics<parallel>], iteration_bounds = array<i64: 1>, scalar_prefetch = 0 : i64, scratch_operands = 0 : i64, tpu.core_type = #tpu.core_type<tc>, window_params = [{transform_indices = @transform_0, window_bounds = array<i64: 2, 4, 256>}, {transform_indices = @transform_1, window_bounds = array<i64: 4, 1>}, {transform_indices = @transform_2, window_bounds = array<i64: 4, 1>}, {transform_indices = @transform_3, window_bounds = array<i64: 2, 4, 256>}, {transform_indices = @transform_4, window_bounds = array<i64: 4, 1>}, {transform_indices = @transform_5, window_bounds = array<i64: 4, 1>}]} {
    %c0 = arith.constant 0 : index
    %c0_0 = arith.constant 0 : index
    %c0_1 = arith.constant 0 : index
    %0 = vector.load %arg1[%c0, %c0_0, %c0_1] : memref<2x4x256xf32, #tpu.memory_space<vmem>>, vector<2x4x256xf32>
    %cst = arith.constant dense<0.000000e+00> : vector<2x4xf32>
    %1 = vector.multi_reduction <add>, %0, %cst [2] : vector<2x4x256xf32> to vector<2x4xf32>
    %2 = vector.shape_cast %1 : vector<2x4xf32> to vector<2x4x1xf32>
    %cst_2 = arith.constant dense<0.000000e+00> : vector<4x1xf32>
    %3 = vector.multi_reduction <add>, %2, %cst_2 [0] : vector<2x4x1xf32> to vector<4x1xf32>
    %cst_3 = arith.constant 0.001953125 : f32
    %4 = vector.broadcast %cst_3 : f32 to vector<4x1xf32>
    %5 = arith.mulf %3, %4 : vector<4x1xf32>
    %6 = vector.shape_cast %5 : vector<4x1xf32> to vector<1x4x1xf32>
    %7 = vector.broadcast %6 : vector<1x4x1xf32> to vector<2x4x256xf32>
    %8 = arith.subf %0, %7 : vector<2x4x256xf32>
    %9 = arith.mulf %8, %8 : vector<2x4x256xf32>
    %cst_4 = arith.constant dense<0.000000e+00> : vector<2x4xf32>
    %10 = vector.multi_reduction <add>, %9, %cst_4 [2] : vector<2x4x256xf32> to vector<2x4xf32>
    %11 = vector.shape_cast %10 : vector<2x4xf32> to vector<2x4x1xf32>
    %cst_5 = arith.constant dense<0.000000e+00> : vector<4x1xf32>
    %12 = vector.multi_reduction <add>, %11, %cst_5 [0] : vector<2x4x1xf32> to vector<4x1xf32>
    %cst_6 = arith.constant 0.001953125 : f32
    %13 = vector.broadcast %cst_6 : f32 to vector<4x1xf32>
    %14 = arith.mulf %12, %13 : vector<4x1xf32>
    %c0_7 = arith.constant 0 : index
    %c0_8 = arith.constant 0 : index
    %15 = vector.load %arg2[%c0_7, %c0_8] : memref<4x1xf32, #tpu.memory_space<vmem>>, vector<4x1xf32>
    %cst_9 = arith.constant 9.99999974E-6 : f32
    %16 = vector.broadcast %cst_9 : f32 to vector<4x1xf32>
    %17 = arith.addf %14, %16 : vector<4x1xf32>
    %18 = math.rsqrt %17 : vector<4x1xf32>
    %19 = arith.mulf %15, %18 : vector<4x1xf32>
    %c0_10 = arith.constant 0 : index
    %c0_11 = arith.constant 0 : index
    %20 = vector.load %arg3[%c0_10, %c0_11] : memref<4x1xf32, #tpu.memory_space<vmem>>, vector<4x1xf32>
    %21 = arith.mulf %5, %19 : vector<4x1xf32>
    %22 = arith.subf %20, %21 : vector<4x1xf32>
    %23 = vector.shape_cast %19 : vector<4x1xf32> to vector<1x4x1xf32>
    %24 = vector.broadcast %23 : vector<1x4x1xf32> to vector<2x4x256xf32>
    %25 = arith.mulf %0, %24 : vector<2x4x256xf32>
    %26 = vector.shape_cast %22 : vector<4x1xf32> to vector<1x4x1xf32>
    %27 = vector.broadcast %26 : vector<1x4x1xf32> to vector<2x4x256xf32>
    %28 = arith.addf %25, %27 : vector<2x4x256xf32>
    %c0_12 = arith.constant 0 : index
    %c0_13 = arith.constant 0 : index
    %c0_14 = arith.constant 0 : index
    %29 = vector.load %arg4[%c0_12, %c0_13, %c0_14] : memref<2x4x256xf32, #tpu.memory_space<vmem>>, vector<2x4x256xf32>
    tpu.vector_store %arg4[%c0_12, %c0_13, %c0_14], %28 {strides = array<i32>} : memref<2x4x256xf32, #tpu.memory_space<vmem>>, vector<2x4x256xf32>,
    %c0_15 = arith.constant 0 : index
    %c0_16 = arith.constant 0 : index
    %30 = vector.load %arg5[%c0_15, %c0_16] : memref<4x1xf32, #tpu.memory_space<vmem>>, vector<4x1xf32>
    tpu.vector_store %arg5[%c0_15, %c0_16], %5 {strides = array<i32>} : memref<4x1xf32, #tpu.memory_space<vmem>>, vector<4x1xf32>,
    %c0_17 = arith.constant 0 : index
    %c0_18 = arith.constant 0 : index
    %31 = vector.load %arg6[%c0_17, %c0_18] : memref<4x1xf32, #tpu.memory_space<vmem>>, vector<4x1xf32>
    tpu.vector_store %arg6[%c0_17, %c0_18], %14 {strides = array<i32>} : memref<4x1xf32, #tpu.memory_space<vmem>>, vector<4x1xf32>,
    return
  }
  func.func @transform_0(%arg0: i32) -> (i32, i32, i32) {
    %c0_i32 = arith.constant 0 : i32
    %c0_i32_0 = arith.constant 0 : i32
    %c0_i32_1 = arith.constant 0 : i32
    return %c0_i32, %arg0, %c0_i32_0 : i32, i32, i32
  }
  func.func @transform_1(%arg0: i32) -> (i32, i32) {
    %c0_i32 = arith.constant 0 : i32
    %c0_i32_0 = arith.constant 0 : i32
    return %arg0, %c0_i32 : i32, i32
  }
  func.func @transform_2(%arg0: i32) -> (i32, i32) {
    %c0_i32 = arith.constant 0 : i32
    %c0_i32_0 = arith.constant 0 : i32
    return %arg0, %c0_i32 : i32, i32
  }
  func.func @transform_3(%arg0: i32) -> (i32, i32, i32) {
    %c0_i32 = arith.constant 0 : i32
    %c0_i32_0 = arith.constant 0 : i32
    %c0_i32_1 = arith.constant 0 : i32
    return %c0_i32, %arg0, %c0_i32_0 : i32, i32, i32
  }
  func.func @transform_4(%arg0: i32) -> (i32, i32) {
    %c0_i32 = arith.constant 0 : i32
    %c0_i32_0 = arith.constant 0 : i32
    return %arg0, %c0_i32 : i32, i32
  }
  func.func @transform_5(%arg0: i32) -> (i32, i32) {
    %c0_i32 = arith.constant 0 : i32
    %c0_i32_0 = arith.constant 0 : i32
    return %arg0, %c0_i32 : i32, i32
  }
}

</mosaic_0001>

<llo_original>
// kernel: tpu_custom_call.1
$region0: #{tpu_custom_call.1}
  #allocation0 [shape = 'u32[]', space=smem, size = 0x4, offset = 0x4, fixed_abs, tag = 'smem constant byte address 0x4 - core index']
  #allocation1 [shape = 'u32[144,128]{1,0:T(1,128)}', space=vmem, size = 0x12000, scoped, tag = 'internal scratch']
  %s0 = inlined_call_operand.hbm [shape: f32[2,4,256], index: 0, kind: input, shape index: {}]
  %s1 = inlined_call_operand.hbm [shape: f32[4,1], index: 1, kind: input, shape index: {}]
  %s2 = inlined_call_operand.hbm [shape: f32[4,1], index: 2, kind: input, shape index: {}]
  %s3 = inlined_call_operand.hbm [shape: f32[2,4,256], index: 3, kind: output, shape index: {0}]
  %s4 = inlined_call_operand.hbm [shape: f32[4,1], index: 4, kind: output, shape index: {1}]
  %s5 = inlined_call_operand.hbm [shape: f32[4,1], index: 5, kind: output, shape index: {2}]
  %6 = xla_tuple %s3, %s4, %s5
  %s7 = sld [smem:[#allocation0]]
  $region50: #{tpu_custom_call.1} parent=0
    _
  %s9 = ssub.s32 1, %s7
  %s10 = scalar_select 0, %s9, %s7
  $region1: #{tpu_custom_call.1} parent=0
    #allocation2 [shape = 'u8[8192]{0}', space=vmem, size = 0x2000, scoped, tag = 'input window, operand 0, single buffered']
    #allocation3 [shape = 's32[1]{0}', space=sflag, size = 0x4, scoped, tag = 'scoped memory for tpu_custom_call.1']
    #allocation4 [shape = 's32[1]{0}', space=sflag, size = 0x4, scoped, tag = 'scoped memory for tpu_custom_call.1']
    #allocation5 [shape = 'u8[2048]{0}', space=vmem, size = 0x800, scoped, tag = 'input window, operand 1, single buffered']
    #allocation6 [shape = 's32[1]{0}', space=sflag, size = 0x4, scoped, tag = 'scoped memory for tpu_custom_call.1']
    #allocation7 [shape = 'u8[2048]{0}', space=vmem, size = 0x800, scoped, tag = 'input window, operand 2, single buffered']
    #allocation8 [shape = 'u8[8192]{0}', space=vmem, size = 0x2000, scoped, tag = 'output window, operand 0, single buffered']
    #allocation9 [shape = 'u8[2048]{0}', space=vmem, size = 0x800, scoped, tag = 'output window, operand 1, single buffered']
    #allocation10 [shape = 's32[1]{0}', space=sflag, size = 0x4, scoped, tag = 'scoped memory for tpu_custom_call.1']
    #allocation11 [shape = 'u8[2048]{0}', space=vmem, size = 0x800, scoped, tag = 'output window, operand 2, single buffered']
    %11 = vsyncpa [#allocation3], 0
    %12 = vsyncpa [#allocation6], 0
    %13 = vsyncpa [#allocation4], 0
    %14 = vsyncpa [#allocation10], 0
    // Predicated region
    $region2: #{tpu_custom_call.1} parent=1 // pred_check
      _
    $region3: #{tpu_custom_call.1} parent=1 // pred_check_branch
      %16 = sbr.rel (0) target = $region5
    $region4: #{tpu_custom_call.1} parent=1 // pred_region
      %s18 = ssub.s32 256, 256
      %19 = vsyncadd [#allocation3], %s18
      %s20 = sshll.u32 [#allocation2], 4
      %s21 = int_to_ptr.vmem [resolvable:$true] %s20
      %26 = dma.hbm_to_vmem [thread:$0]  %s0, 256, %s21, [#allocation3], 128, 128, 8
    $region5: #{tpu_custom_call.1} parent=1 // pred_fallthru
      _
    // Predicated region
    $region6: #{tpu_custom_call.1} parent=1 // pred_check
      _
    $region7: #{tpu_custom_call.1} parent=1 // pred_check_branch
      %28 = sbr.rel (0) target = $region9
    $region8: #{tpu_custom_call.1} parent=1 // pred_region
      %s30 = ssub.s32 64, 64
      %31 = vsyncadd [#allocation6], %s30
      %s33 = sshll.u32 [#allocation5], 4
      %s34 = int_to_ptr.vmem [resolvable:$true] %s33
      %36 = dma.hbm_to_vmem [thread:$0]  %s1, 64, %s34, [#allocation6]
    $region9: #{tpu_custom_call.1} parent=1 // pred_fallthru
      _
    // Predicated region
    $region10: #{tpu_custom_call.1} parent=1 // pred_check
      _
    $region11: #{tpu_custom_call.1} parent=1 // pred_check_branch
      %38 = sbr.rel (0) target = $region13
    $region12: #{tpu_custom_call.1} parent=1 // pred_region
      %s40 = ssub.s32 64, 64
      %41 = vsyncadd [#allocation6], %s40
      %s43 = sshll.u32 [#allocation7], 4
      %s44 = int_to_ptr.vmem [resolvable:$true] %s43
      %46 = dma.hbm_to_vmem [thread:$0]  %s2, 64, %s44, [#allocation6]
    $region13: #{tpu_custom_call.1} parent=1 // pred_fallthru
      _
    // Predicated region
    $region14: #{tpu_custom_call.1} parent=1 // pred_check
      _
    $region15: #{tpu_custom_call.1} parent=1 // pred_check_branch
      %48 = sbr.rel (0) target = $region17
    $region16: #{tpu_custom_call.1} parent=1 // pred_region
      %49 = dma.done [#allocation3], 256
    $region17: #{tpu_custom_call.1} parent=1 // pred_fallthru
      _
    // Predicated region
    $region18: #{tpu_custom_call.1} parent=1 // pred_check
      _
    $region19: #{tpu_custom_call.1} parent=1 // pred_check_branch
      %51 = sbr.rel (0) target = $region21
    $region20: #{tpu_custom_call.1} parent=1 // pred_region
      %52 = dma.done [#allocation6], 64
    $region21: #{tpu_custom_call.1} parent=1 // pred_fallthru
      _
    // Predicated region
    $region22: #{tpu_custom_call.1} parent=1 // pred_check
      _
    $region23: #{tpu_custom_call.1} parent=1 // pred_check_branch
      %54 = sbr.rel (0) target = $region25
    $region24: #{tpu_custom_call.1} parent=1 // pred_region
      %55 = dma.done [#allocation6], 64
    $region25: #{tpu_custom_call.1} parent=1 // pred_fallthru
      _
    %v56 = vld [vmem:[#allocation2] sm:$0xff]
    %v57 = vld [vmem:[#allocation2 + $0x8] sm:$0xff]
    %v60 = vcombine.high %v56, %v56
    %v61 = vcombine.high %v57, %v57
    %vm64 = vcmask 1043456
    %v65 = vsel %vm64, %v56, 0.0
    %v66 = vsel %vm64, %v60, 0.0
    %v67 = vadd.f32 %v65, %v66
    %68 = vadd.xlane.f32.xlu0 %v67
    %v69 = vpop.xlane.xlu0 %68
    %v70 = vsel %vm64, %v57, 0.0
    %v71 = vsel %vm64, %v61, 0.0
    %v72 = vadd.f32 %v70, %v71
    %73 = vadd.xlane.f32.xlu0 %v72
    %v74 = vpop.xlane.xlu0 %73
    %v75 = vsel %vm64, %v69, 0.0
    %v76 = vsel %vm64, %v74, 0.0
    %v77 = vadd.f32 %v75, %v76
    %v78 = vmul.f32 %v77, 0.001953125
    %v81 = vunpack.c.l.s4 839922192
    %v82 = vunpack.c.0.s8 %v81
    %v83 = vlaneseq
    %v84 = vshrl.u32 %v83, 7
    %v85 = vsub.s32 %v82, %v84
    %v86 = vrot.slane %v78, %v85
    %v88 = vsub.f32 %v56, %v86
    %v89 = vsub.f32 %v57, %v86
    %v90 = vmul.f32 %v88, %v88
    %v91 = vmul.f32 %v89, %v89
    %v94 = vcombine.high %v90, %v90
    %v95 = vcombine.high %v91, %v91
    %v98 = vsel %vm64, %v90, 0.0
    %v99 = vsel %vm64, %v94, 0.0
    %v100 = vadd.f32 %v98, %v99
    %101 = vadd.xlane.f32.xlu0 %v100
    %v102 = vpop.xlane.xlu0 %101
    %v103 = vsel %vm64, %v91, 0.0
    %v104 = vsel %vm64, %v95, 0.0
    %v105 = vadd.f32 %v103, %v104
    %106 = vadd.xlane.f32.xlu0 %v105
    %v107 = vpop.xlane.xlu0 %106
    %v108 = vsel %vm64, %v102, 0.0
    %v109 = vsel %vm64, %v107, 0.0
    %v110 = vadd.f32 %v108, %v109
    %v111 = vmul.f32 %v110, 0.001953125
    %v112 = vld [vmem:[#allocation5] sm:$0xf]
    %v113 = vadd.f32 %v111, 1e-05
    %v114 = vrsqrt.pop %v113
    %v115 = vmul.f32 %v112, %v114
    %v116 = vld [vmem:[#allocation7] sm:$0xf]
    %v117 = vmul.f32 %v78, %v115
    %v118 = vsub.f32 %v116, %v117
    %120 = vset.pattern.permute.xlu0 0
    %121 = vperm.xlu0 %120, %v115
    %v122 = vpop.permute.xlu0 %121
    %v124 = vunpack.c.l.s4 839922192
    %v125 = vunpack.c.0.s8 %v124
    %v126 = vlaneseq
    %v127 = vshrl.u32 %v126, 7
    %v128 = vsub.s32 %v125, %v127
    %v129 = vrot.slane %v122, %v128
    %v131 = vmul.f32 %v56, %v129
    %v132 = vmul.f32 %v57, %v129
    %134 = vset.pattern.permute.xlu0 0
    %135 = vperm.xlu0 %134, %v118
    %v136 = vpop.permute.xlu0 %135
    %v138 = vunpack.c.l.s4 839922192
    %v139 = vunpack.c.0.s8 %v138
    %v140 = vlaneseq
    %v141 = vshrl.u32 %v140, 7
    %v142 = vsub.s32 %v139, %v141
    %v143 = vrot.slane %v136, %v142
    %v145 = vadd.f32 %v131, %v143
    %v146 = vadd.f32 %v132, %v143
    %147 = vst [vmem:[#allocation8] sm:$0xff] %v145
    %148 = vst [vmem:[#allocation8 + $0x8] sm:$0xff] %v146
    %vm149 = vcmask 3072
    %150 = vst.msk [vmem:[#allocation9] sm:$0xf] %vm149, %v78
    %151 = vst.msk [vmem:[#allocation11] sm:$0xf] %vm149, %v111
    // Predicated region
    $region26: #{tpu_custom_call.1} parent=1 // pred_check
      _
    $region27: #{tpu_custom_call.1} parent=1 // pred_check_branch
      %153 = sbr.rel (0) target = $region29
    $region28: #{tpu_custom_call.1} parent=1 // pred_region
      %s155 = ssub.s32 256, 256
      %156 = vsyncadd [#allocation4], %s155
      %s157 = sshll.u32 [#allocation8], 4
      %s158 = int_to_ptr.vmem [resolvable:$true] %s157
      %163 = dma.vmem_to_hbm [thread:$0]  %s158, 256, %s3, [#allocation4], 128, 128, 8
    $region29: #{tpu_custom_call.1} parent=1 // pred_fallthru
      _
    // Predicated region
    $region30: #{tpu_custom_call.1} parent=1 // pred_check
      _
    $region31: #{tpu_custom_call.1} parent=1 // pred_check_branch
      %165 = sbr.rel (0) target = $region33
    $region32: #{tpu_custom_call.1} parent=1 // pred_region
      %s167 = ssub.s32 64, 64
      %168 = vsyncadd [#allocation10], %s167
      %s170 = sshll.u32 [#allocation9], 4
      %s171 = int_to_ptr.vmem [resolvable:$true] %s170
      %173 = dma.vmem_to_hbm [thread:$0]  %s171, 64, %s4, [#allocation10]
    $region33: #{tpu_custom_call.1} parent=1 // pred_fallthru
      _
    // Predicated region
    $region34: #{tpu_custom_call.1} parent=1 // pred_check
      _
    $region35: #{tpu_custom_call.1} parent=1 // pred_check_branch
      %175 = sbr.rel (0) target = $region37
    $region36: #{tpu_custom_call.1} parent=1 // pred_region
      %s177 = ssub.s32 64, 64
      %178 = vsyncadd [#allocation10], %s177
      %s180 = sshll.u32 [#allocation11], 4
      %s181 = int_to_ptr.vmem [resolvable:$true] %s180
      %183 = dma.vmem_to_hbm [thread:$0]  %s181, 64, %s5, [#allocation10]
    $region37: #{tpu_custom_call.1} parent=1 // pred_fallthru
      _
    // Predicated region
    $region38: #{tpu_custom_call.1} parent=1 // pred_check
      _
    $region39: #{tpu_custom_call.1} parent=1 // pred_check_branch
      %185 = sbr.rel (0) target = $region41
    $region40: #{tpu_custom_call.1} parent=1 // pred_region
      %186 = dma.done [#allocation4], 256
    $region41: #{tpu_custom_call.1} parent=1 // pred_fallthru
      _
    // Predicated region
    $region42: #{tpu_custom_call.1} parent=1 // pred_check
      _
    $region43: #{tpu_custom_call.1} parent=1 // pred_check_branch
      %188 = sbr.rel (0) target = $region45
    $region44: #{tpu_custom_call.1} parent=1 // pred_region
      %189 = dma.done [#allocation10], 64
    $region45: #{tpu_custom_call.1} parent=1 // pred_fallthru
      _
    // Predicated region
    $region46: #{tpu_custom_call.1} parent=1 // pred_check
      _
    $region47: #{tpu_custom_call.1} parent=1 // pred_check_branch
      %191 = sbr.rel (0) target = $region49
    $region48: #{tpu_custom_call.1} parent=1 // pred_region
      %192 = dma.done [#allocation10], 64
    $region49: #{tpu_custom_call.1} parent=1 // pred_fallthru
      _
    %193 = vsyncpa [#allocation3], 1
    %194 = vsyncpa [#allocation6], 1
    %195 = vsyncpa [#allocation4], 1
    %196 = vsyncpa [#allocation10], 1

</llo_original>
